<compile_context>
chip_gen: v6e
topology: v6e:2x2x1
jax: 0.10.0
libtpu: 0.0.40
codegen_flags: <defaults>
</compile_context>

<pallas_src>
import jax
import jax.numpy as jnp
from jax.experimental import pallas as pl
from jax.experimental.pallas import tpu as pltpu


def _round_up(a, b):
    return (a + b - 1) // b * b


def residual_kernel(xres_ref, xc_ref, w12_ref, b1_ref, w3_ref, b2_ref, o_ref):
    # Fused input matmul: [x | x2] @ [W1 ; W2]   (bf16 MXU inputs, f32 accum)
    h = (jnp.dot(xc_ref[...], w12_ref[...],
                 preferred_element_type=jnp.float32)
         + b1_ref[...])
    # TODO(synk): PyTorch nn.GELU defaults to exact erf; tanh approximation
    # (jax.nn.gelu default) is used so the transcendental lands on the EUP.
    h = jax.nn.gelu(h)
    y = jnp.dot(h.astype(jnp.bfloat16), w3_ref[...],
                preferred_element_type=jnp.float32)
    # Residual: fn(x, x2) + x  -- residual add kept in exact f32.
    o_ref[...] = (y + b2_ref[...] + xres_ref[...]).astype(o_ref.dtype)


def residual(x, x2, w1, w2, b1, w3, b2, *, tm=256):
    B, N, D = x.shape
    H = w1.shape[1]
    M = B * N

    # Lane-dense padding of feature dims; 16-aligned row tile (bf16 sublanes).
    Dp = _round_up(D, 128)
    Hp = _round_up(H, 128)
    tm = max(16, min(tm, _round_up(M, 16)))
    Mp = _round_up(M, tm)
    grid = Mp // tm

    f32, bf16 = jnp.float32, jnp.bfloat16

    xf = jnp.pad(x.reshape(M, D).astype(f32), ((0, Mp - M), (0, Dp - D)))
    x2f = jnp.pad(x2.reshape(M, D).astype(f32), ((0, Mp - M), (0, Dp - D)))
    # Fused matmul operand [x | x2] in bf16; xf stays f32 for the residual add.
    xc = jnp.concatenate([xf, x2f], axis=-1).astype(bf16)

    # Stacked weight [W1 ; W2] -> (2*Dp, Hp), bf16 for the MXU.
    w12 = jnp.concatenate(
        [jnp.pad(w1, ((0, Dp - D), (0, Hp - H))),
         jnp.pad(w2, ((0, Dp - D), (0, Hp - H)))], axis=0).astype(bf16)
    w3p = jnp.pad(w3, ((0, Hp - H), (0, Dp - D))).astype(bf16)
    b1p = jnp.pad(b1, ((0, 0), (0, Hp - H))).astype(f32)
    b2p = jnp.pad(b2, ((0, 0), (0, Dp - D))).astype(f32)

    cost = pl.CostEstimate(
        flops=2 * Mp * (2 * Dp * Hp + Hp * Dp),
        transcendentals=Mp * Hp,
        bytes_accessed=(xf.size * 4 + xc.size * 2 + w12.size * 2
                        + w3p.size * 2 + b1p.size * 4 + b2p.size * 4
                        + Mp * Dp * 4),
    )

    out = pl.pallas_call(
        residual_kernel,
        out_shape=jax.ShapeDtypeStruct((Mp, Dp), x.dtype),
        grid_spec=pltpu.PrefetchScalarGridSpec(
            num_scalar_prefetch=0,
            grid=(grid,),
            in_specs=[
                pl.BlockSpec((tm, Dp), lambda i: (i, 0)),       # x (f32, residual)
                pl.BlockSpec((tm, 2 * Dp), lambda i: (i, 0)),   # [x|x2] (bf16)
                pl.BlockSpec((2 * Dp, Hp), lambda i: (0, 0)),   # W12 (resident)
                pl.BlockSpec((1, Hp), lambda i: (0, 0)),        # b1
                pl.BlockSpec((Hp, Dp), lambda i: (0, 0)),       # W3 (resident)
                pl.BlockSpec((1, Dp), lambda i: (0, 0)),        # b2
            ],
            out_specs=pl.BlockSpec((tm, Dp), lambda i: (i, 0)),
        ),
        compiler_params=pltpu.CompilerParams(
            dimension_semantics=("parallel",),
            vmem_limit_bytes=32 * 1024 * 1024,
        ),
        cost_estimate=cost,
    )(xf, xc, w12, b1p, w3p, b2p)

    return out[:M, :D].reshape(B, N, D)


def residual_ref(x, x2, w1, w2, b1, w3, b2):
    h = jax.nn.gelu(x @ w1 + x2 @ w2 + b1)
    return (h @ w3 + b2) + x


if __name__ == "__main__":
    B, N, D, H = 2, 8, 32, 64   # batch, seq, hidden, inner-hidden

    key = jax.random.PRNGKey(0)
    kx, kx2, k1, k2, k3, k4, k5 = jax.random.split(key, 7)

    x = jax.random.normal(kx, (B, N, D), dtype=jnp.float32)
    x2 = jax.random.normal(kx2, (B, N, D), dtype=jnp.float32)

    # deterministic parameter init (synthetic, not a checkpoint)
    w1 = jax.random.normal(k1, (D, H), dtype=jnp.float32) * 0.05
    w2 = jax.random.normal(k2, (D, H), dtype=jnp.float32) * 0.05
    b1 = jax.random.normal(k3, (1, H), dtype=jnp.float32) * 0.01
    w3 = jax.random.normal(k4, (H, D), dtype=jnp.float32) * 0.05
    b2 = jax.random.normal(k5, (1, D), dtype=jnp.float32) * 0.01

    out = residual(x, x2, w1, w2, b1, w3, b2)
    out = jax.block_until_ready(out)

    ref = residual_ref(x, x2, w1, w2, b1, w3, b2)
    assert out.shape == (B, N, D)
    # bf16 MXU inputs with f32 accumulation -> ~1e-3 level deviation from the
    # pure-f32 reference; residual add itself is exact f32.
    assert jnp.allclose(out, ref, atol=2e-2, rtol=2e-2), float(
        jnp.max(jnp.abs(out - ref)))

    print("KERNEL_OK")
</pallas_src>

<mosaic_0001>
module attributes {stable_mosaic.version = 11 : i64} {
  func.func @residual_kernel(%arg0: i32, %arg1: memref<16x128xf32, #tpu.memory_space<vmem>>, %arg2: memref<16x256xbf16, #tpu.memory_space<vmem>>, %arg3: memref<256x128xbf16, #tpu.memory_space<vmem>>, %arg4: memref<1x128xf32, #tpu.memory_space<vmem>>, %arg5: memref<128x128xbf16, #tpu.memory_space<vmem>>, %arg6: memref<1x128xf32, #tpu.memory_space<vmem>>, %arg7: memref<16x128xf32, #tpu.memory_space<vmem>>) attributes {dimension_semantics = [#tpu.dimension_semantics<parallel>], iteration_bounds = array<i64: 1>, scalar_prefetch = 0 : i64, scratch_operands = 0 : i64, tpu.core_type = #tpu.core_type<tc>, window_params = [{transform_indices = @transform_0, window_bounds = array<i64: 16, 128>}, {transform_indices = @transform_1, window_bounds = array<i64: 16, 256>}, {pipeline_mode = #tpu.pipeline_mode<synchronous>, transform_indices = @transform_2, window_bounds = array<i64: 256, 128>}, {pipeline_mode = #tpu.pipeline_mode<synchronous>, transform_indices = @transform_3, window_bounds = array<i64: 1, 128>}, {pipeline_mode = #tpu.pipeline_mode<synchronous>, transform_indices = @transform_4, window_bounds = array<i64: 128, 128>}, {pipeline_mode = #tpu.pipeline_mode<synchronous>, transform_indices = @transform_5, window_bounds = array<i64: 1, 128>}, {transform_indices = @transform_6, window_bounds = array<i64: 16, 128>}]} {
    %c0 = arith.constant 0 : index
    %c0_0 = arith.constant 0 : index
    %0 = vector.load %arg2[%c0, %c0_0] : memref<16x256xbf16, #tpu.memory_space<vmem>>, vector<16x256xbf16>
    %c0_1 = arith.constant 0 : index
    %c0_2 = arith.constant 0 : index
    %1 = vector.load %arg3[%c0_1, %c0_2] : memref<256x128xbf16, #tpu.memory_space<vmem>>, vector<256x128xbf16>
    %cst = arith.constant dense<0.000000e+00> : vector<16x128xf32>
    %2 = tpu.matmul %0, %1, %cst {dimension_numbers = #tpu.dot_dimension_numbers<[1], [0], [0], [1], [0, 0, 1, 1], [], []>} : vector<16x256xbf16>, vector<256x128xbf16>, vector<16x128xf32> -> vector<16x128xf32>
    %c0_3 = arith.constant 0 : index
    %c0_4 = arith.constant 0 : index
    %3 = vector.load %arg4[%c0_3, %c0_4] : memref<1x128xf32, #tpu.memory_space<vmem>>, vector<1x128xf32>
    %4 = vector.broadcast %3 : vector<1x128xf32> to vector<16x128xf32>
    %5 = arith.addf %2, %4 : vector<16x128xf32>
    %6 = arith.mulf %5, %5 : vector<16x128xf32>
    %7 = arith.mulf %5, %6 : vector<16x128xf32>
    %cst_5 = arith.constant 4.471500e-02 : f32
    %8 = vector.broadcast %cst_5 : f32 to vector<16x128xf32>
    %9 = arith.mulf %8, %7 : vector<16x128xf32>
    %10 = arith.addf %5, %9 : vector<16x128xf32>
    %cst_6 = arith.constant 0.797884583 : f32
    %11 = vector.broadcast %cst_6 : f32 to vector<16x128xf32>
    %12 = arith.mulf %11, %10 : vector<16x128xf32>
    %13 = math.tanh %12 : vector<16x128xf32>
    %cst_7 = arith.constant 1.000000e+00 : f32
    %14 = vector.broadcast %cst_7 : f32 to vector<16x128xf32>
    %15 = arith.addf %14, %13 : vector<16x128xf32>
    %cst_8 = arith.constant 5.000000e-01 : f32
    %16 = vector.broadcast %cst_8 : f32 to vector<16x128xf32>
    %17 = arith.mulf %16, %15 : vector<16x128xf32>
    %18 = arith.mulf %5, %17 : vector<16x128xf32>
    %19 = arith.truncf %18 : vector<16x128xf32> to vector<16x128xbf16>
    %c0_9 = arith.constant 0 : index
    %c0_10 = arith.constant 0 : index
    %20 = vector.load %arg5[%c0_9, %c0_10] : memref<128x128xbf16, #tpu.memory_space<vmem>>, vector<128x128xbf16>
    %cst_11 = arith.constant dense<0.000000e+00> : vector<16x128xf32>
    %21 = tpu.matmul %19, %20, %cst_11 {dimension_numbers = #tpu.dot_dimension_numbers<[1], [0], [0], [1], [0, 0, 1, 1], [], []>} : vector<16x128xbf16>, vector<128x128xbf16>, vector<16x128xf32> -> vector<16x128xf32>
    %c0_12 = arith.constant 0 : index
    %c0_13 = arith.constant 0 : index
    %22 = vector.load %arg6[%c0_12, %c0_13] : memref<1x128xf32, #tpu.memory_space<vmem>>, vector<1x128xf32>
    %23 = vector.broadcast %22 : vector<1x128xf32> to vector<16x128xf32>
    %24 = arith.addf %21, %23 : vector<16x128xf32>
    %c0_14 = arith.constant 0 : index
    %c0_15 = arith.constant 0 : index
    %25 = vector.load %arg1[%c0_14, %c0_15] : memref<16x128xf32, #tpu.memory_space<vmem>>, vector<16x128xf32>
    %26 = arith.addf %24, %25 : vector<16x128xf32>
    %c0_16 = arith.constant 0 : index
    %c0_17 = arith.constant 0 : index
    %27 = vector.load %arg7[%c0_16, %c0_17] : memref<16x128xf32, #tpu.memory_space<vmem>>, vector<16x128xf32>
    tpu.vector_store %arg7[%c0_16, %c0_17], %26 {strides = array<i32>} : memref<16x128xf32, #tpu.memory_space<vmem>>, vector<16x128xf32>,
    return
  }
  func.func @transform_0(%arg0: i32) -> (i32, i32) {
    %c0_i32 = arith.constant 0 : i32
    %c0_i32_0 = arith.constant 0 : i32
    return %arg0, %c0_i32 : i32, i32
  }
  func.func @transform_1(%arg0: i32) -> (i32, i32) {
    %c0_i32 = arith.constant 0 : i32
    %c0_i32_0 = arith.constant 0 : i32
    return %arg0, %c0_i32 : i32, i32
  }
  func.func @transform_2(%arg0: i32) -> (i32, i32) {
    %c0_i32 = arith.constant 0 : i32
    %c0_i32_0 = arith.constant 0 : i32
    %c0_i32_1 = arith.constant 0 : i32
    return %c0_i32, %c0_i32_0 : i32, i32
  }
  func.func @transform_3(%arg0: i32) -> (i32, i32) {
    %c0_i32 = arith.constant 0 : i32
    %c0_i32_0 = arith.constant 0 : i32
    %c0_i32_1 = arith.constant 0 : i32
    return %c0_i32, %c0_i32_0 : i32, i32
  }
  func.func @transform_4(%arg0: i32) -> (i32, i32) {
    %c0_i32 = arith.constant 0 : i32
    %c0_i32_0 = arith.constant 0 : i32
    %c0_i32_1 = arith.constant 0 : i32
    return %c0_i32, %c0_i32_0 : i32, i32
  }
  func.func @transform_5(%arg0: i32) -> (i32, i32) {
    %c0_i32 = arith.constant 0 : i32
    %c0_i32_0 = arith.constant 0 : i32
    %c0_i32_1 = arith.constant 0 : i32
    return %c0_i32, %c0_i32_0 : i32, i32
  }
  func.func @transform_6(%arg0: i32) -> (i32, i32) {
    %c0_i32 = arith.constant 0 : i32
    %c0_i32_0 = arith.constant 0 : i32
    return %arg0, %c0_i32 : i32, i32
  }
}

</mosaic_0001>

<llo_original>
// kernel: tpu_custom_call.1
$region0: #{tpu_custom_call.1}
  #allocation0 [shape = 'u32[]', space=smem, size = 0x4, offset = 0x4, fixed_abs, tag = 'smem constant byte address 0x4 - core index']
  #allocation1 [shape = 'u32[144,128]{1,0:T(1,128)}', space=vmem, size = 0x12000, scoped, tag = 'internal scratch']
  %s0 = inlined_call_operand.hbm [shape: f32[16,128], index: 0, kind: input, shape index: {}]
  %s1 = inlined_call_operand.hbm [shape: bf16[16,256], index: 1, kind: input, shape index: {}]
  %s2 = inlined_call_operand.hbm [shape: bf16[256,128], index: 2, kind: input, shape index: {}]
  %s3 = inlined_call_operand.vmem [shape: f32[1,128], index: 3, kind: input, shape index: {}]
  %s4 = inlined_call_operand.hbm [shape: bf16[128,128], index: 4, kind: input, shape index: {}]
  %s5 = inlined_call_operand.vmem [shape: f32[1,128], index: 5, kind: input, shape index: {}]
  %s6 = inlined_call_operand.hbm [shape: f32[16,128], index: 6, kind: output, shape index: {}]
  %s7 = sld [smem:[#allocation0]]
  $region50: #{tpu_custom_call.1} parent=0
    _
  %s9 = ssub.s32 1, %s7
  %s10 = scalar_select 0, %s9, %s7
  $region1: #{tpu_custom_call.1} parent=0
    #allocation2 [shape = 'u8[8192]{0}', space=vmem, size = 0x2000, scoped, tag = 'input window, operand 0, single buffered']
    #allocation3 [shape = 's32[1]{0}', space=sflag, size = 0x4, scoped, tag = 'scoped memory for tpu_custom_call.1']
    #allocation4 [shape = 's32[1]{0}', space=sflag, size = 0x4, scoped, tag = 'scoped memory for tpu_custom_call.1']
    #allocation5 [shape = 'u8[8192]{0}', space=vmem, size = 0x2000, scoped, tag = 'input window, operand 1, single buffered']
    #allocation6 [shape = 's32[1]{0}', space=sflag, size = 0x4, scoped, tag = 'scoped memory for tpu_custom_call.1']
    #allocation7 [shape = 'u8[65536]{0}', space=vmem, size = 0x10000, scoped, tag = 'input window, operand 2, single buffered']
    #allocation8 [shape = 'u8[32768]{0}', space=vmem, size = 0x8000, scoped, tag = 'input window, operand 4, single buffered']
    #allocation9 [shape = 's32[1]{0}', space=sflag, size = 0x4, scoped, tag = 'scoped memory for tpu_custom_call.1']
    #allocation10 [shape = 'u8[8192]{0}', space=vmem, size = 0x2000, scoped, tag = 'output window, operand 0, single buffered']
    %11 = vsyncpa [#allocation3], 0
    %12 = vsyncpa [#allocation6], 0
    %13 = vsyncpa [#allocation9], 0
    %14 = vsyncpa [#allocation4], 0
    // Predicated region
    $region2: #{tpu_custom_call.1} parent=1 // pred_check
      _
    $region3: #{tpu_custom_call.1} parent=1 // pred_check_branch
      %16 = sbr.rel (0) target = $region5
    $region4: #{tpu_custom_call.1} parent=1 // pred_region
      %s18 = ssub.s32 256, 256
      %19 = vsyncadd [#allocation3], %s18
      %s20 = sshll.u32 [#allocation2], 4
      %s21 = int_to_ptr.vmem [resolvable:$true] %s20
      %26 = dma.hbm_to_vmem [thread:$0]  %s0, 256, %s21, [#allocation3], 128, 128, 8
    $region5: #{tpu_custom_call.1} parent=1 // pred_fallthru
      _
    // Predicated region
    $region6: #{tpu_custom_call.1} parent=1 // pred_check
      _
    $region7: #{tpu_custom_call.1} parent=1 // pred_check_branch
      %28 = sbr.rel (0) target = $region9
    $region8: #{tpu_custom_call.1} parent=1 // pred_region
      %s30 = ssub.s32 256, 256
      %31 = vsyncadd [#allocation6], %s30
      %s32 = sshll.u32 [#allocation5], 4
      %s33 = int_to_ptr.vmem [resolvable:$true] %s32
      %38 = dma.hbm_to_vmem [thread:$0]  %s1, 256, %s33, [#allocation6], 128, 128, 8
    $region9: #{tpu_custom_call.1} parent=1 // pred_fallthru
      _
    // Predicated region
    $region10: #{tpu_custom_call.1} parent=1 // pred_check
      _
    $region11: #{tpu_custom_call.1} parent=1 // pred_check_branch
      %40 = sbr.rel (0) target = $region13
    $region12: #{tpu_custom_call.1} parent=1 // pred_region
      %s42 = ssub.s32 2048, 2048
      %43 = vsyncadd [#allocation6], %s42
      %s44 = sshll.u32 [#allocation7], 4
      %s45 = int_to_ptr.vmem [resolvable:$true] %s44
      %50 = dma.hbm_to_vmem [thread:$0]  %s2, 2048, %s45, [#allocation6], 64, 64, 4
    $region13: #{tpu_custom_call.1} parent=1 // pred_fallthru
      _
    // Predicated region
    $region14: #{tpu_custom_call.1} parent=1 // pred_check
      _
    $region15: #{tpu_custom_call.1} parent=1 // pred_check_branch
      %52 = sbr.rel (0) target = $region17
    $region16: #{tpu_custom_call.1} parent=1 // pred_region
      _
    $region17: #{tpu_custom_call.1} parent=1 // pred_fallthru
      _
    // Predicated region
    $region18: #{tpu_custom_call.1} parent=1 // pred_check
      _
    $region19: #{tpu_custom_call.1} parent=1 // pred_check_branch
      %54 = sbr.rel (0) target = $region21
    $region20: #{tpu_custom_call.1} parent=1 // pred_region
      %s56 = ssub.s32 1024, 1024
      %57 = vsyncadd [#allocation9], %s56
      %s58 = sshll.u32 [#allocation8], 4
      %s59 = int_to_ptr.vmem [resolvable:$true] %s58
      %64 = dma.hbm_to_vmem [thread:$0]  %s4, 1024, %s59, [#allocation9], 64, 64, 4
    $region21: #{tpu_custom_call.1} parent=1 // pred_fallthru
      _
    // Predicated region
    $region22: #{tpu_custom_call.1} parent=1 // pred_check
      _
    $region23: #{tpu_custom_call.1} parent=1 // pred_check_branch
      %66 = sbr.rel (0) target = $region25
    $region24: #{tpu_custom_call.1} parent=1 // pred_region
      _
    $region25: #{tpu_custom_call.1} parent=1 // pred_fallthru
      _
    // Predicated region
    $region26: #{tpu_custom_call.1} parent=1 // pred_check
      _
    $region27: #{tpu_custom_call.1} parent=1 // pred_check_branch
      %68 = sbr.rel (0) target = $region29
    $region28: #{tpu_custom_call.1} parent=1 // pred_region
      %69 = dma.done [#allocation3], 256
    $region29: #{tpu_custom_call.1} parent=1 // pred_fallthru
      _
    // Predicated region
    $region30: #{tpu_custom_call.1} parent=1 // pred_check
      _
    $region31: #{tpu_custom_call.1} parent=1 // pred_check_branch
      %71 = sbr.rel (0) target = $region33
    $region32: #{tpu_custom_call.1} parent=1 // pred_region
      %72 = dma.done [#allocation6], 256
    $region33: #{tpu_custom_call.1} parent=1 // pred_fallthru
      _
    // Predicated region
    $region34: #{tpu_custom_call.1} parent=1 // pred_check
      _
    $region35: #{tpu_custom_call.1} parent=1 // pred_check_branch
      %74 = sbr.rel (0) target = $region37
    $region36: #{tpu_custom_call.1} parent=1 // pred_region
      %75 = dma.done [#allocation6], 2048
    $region37: #{tpu_custom_call.1} parent=1 // pred_fallthru
      _
    // Predicated region
    $region38: #{tpu_custom_call.1} parent=1 // pred_check
      _
    $region39: #{tpu_custom_call.1} parent=1 // pred_check_branch
      %77 = sbr.rel (0) target = $region41
    $region40: #{tpu_custom_call.1} parent=1 // pred_region
      %78 = dma.done [#allocation9], 1024
    $region41: #{tpu_custom_call.1} parent=1 // pred_fallthru
      _
    %v80 = vld [vmem:[#allocation5] sm:$0xff]
    %v81 = vld [vmem:[#allocation5 + $0x8] sm:$0xff]
    %v82 = vld [vmem:[#allocation7] sm:$0xf]
    %v83 = vld [vmem:[#allocation7 + $0x4] sm:$0xf]
    %v84 = vld [vmem:[#allocation7 + $0x8] sm:$0xf]
    %v85 = vld [vmem:[#allocation7 + $0xc] sm:$0xf]
    %v86 = vld [vmem:[#allocation7 + $0x10] sm:$0xf]
    %v87 = vld [vmem:[#allocation7 + $0x14] sm:$0xf]
    %v88 = vld [vmem:[#allocation7 + $0x18] sm:$0xf]
    %v89 = vld [vmem:[#allocation7 + $0x1c] sm:$0xf]
    %v90 = vld [vmem:[#allocation7 + $0x20] sm:$0xf]
    %v91 = vld [vmem:[#allocation7 + $0x24] sm:$0xf]
    %v92 = vld [vmem:[#allocation7 + $0x28] sm:$0xf]
    %v93 = vld [vmem:[#allocation7 + $0x2c] sm:$0xf]
    %v94 = vld [vmem:[#allocation7 + $0x30] sm:$0xf]
    %v95 = vld [vmem:[#allocation7 + $0x34] sm:$0xf]
    %v96 = vld [vmem:[#allocation7 + $0x38] sm:$0xf]
    %v97 = vld [vmem:[#allocation7 + $0x3c] sm:$0xf]
    %v98 = vld [vmem:[#allocation7 + $0x40] sm:$0xf]
    %v99 = vld [vmem:[#allocation7 + $0x44] sm:$0xf]
    %v100 = vld [vmem:[#allocation7 + $0x48] sm:$0xf]
    %v101 = vld [vmem:[#allocation7 + $0x4c] sm:$0xf]
    %v102 = vld [vmem:[#allocation7 + $0x50] sm:$0xf]
    %v103 = vld [vmem:[#allocation7 + $0x54] sm:$0xf]
    %v104 = vld [vmem:[#allocation7 + $0x58] sm:$0xf]
    %v105 = vld [vmem:[#allocation7 + $0x5c] sm:$0xf]
    %v106 = vld [vmem:[#allocation7 + $0x60] sm:$0xf]
    %v107 = vld [vmem:[#allocation7 + $0x64] sm:$0xf]
    %v108 = vld [vmem:[#allocation7 + $0x68] sm:$0xf]
    %v109 = vld [vmem:[#allocation7 + $0x6c] sm:$0xf]
    %v110 = vld [vmem:[#allocation7 + $0x70] sm:$0xf]
    %v111 = vld [vmem:[#allocation7 + $0x74] sm:$0xf]
    %v112 = vld [vmem:[#allocation7 + $0x78] sm:$0xf]
    %v113 = vld [vmem:[#allocation7 + $0x7c] sm:$0xf]
    %v114 = vld [vmem:[%s3] sm:$0x1]
    %v116 = vlaneseq
    %v117 = vshrl.u32 %v116, 7
    %v118 = vsub.s32 0, %v117
    %v119 = vrot.slane %v114, %v118
    %v123 = vunpack.c.l.b16 %v80
    %v124 = vunpack.c.h.b16 %v80
    %v125 = vunpack.c.l.b16 %v81
    %v126 = vunpack.c.h.b16 %v81
    %v127 = vpack.c.b16 %v125, %v123
    %v128 = vpack.c.b16 %v126, %v124
    %v163 = vunpack.c.l.b16 %v82
    %v164 = vunpack.c.l.b16 %v83
    %v165 = vunpack.c.l.b16 %v84
    %v166 = vunpack.c.l.b16 %v85
    %v167 = vunpack.c.l.b16 %v86
    %v168 = vunpack.c.l.b16 %v87
    %v169 = vunpack.c.l.b16 %v88
    %v170 = vunpack.c.l.b16 %v89
    %v171 = vunpack.c.l.b16 %v90
    %v172 = vunpack.c.l.b16 %v91
    %v173 = vunpack.c.l.b16 %v92
    %v174 = vunpack.c.l.b16 %v93
    %v175 = vunpack.c.l.b16 %v94
    %v176 = vunpack.c.l.b16 %v95
    %v177 = vunpack.c.l.b16 %v96
    %v178 = vunpack.c.l.b16 %v97
    %v179 = vunpack.c.l.b16 %v98
    %v180 = vunpack.c.l.b16 %v99
    %v181 = vunpack.c.l.b16 %v100
    %v182 = vunpack.c.l.b16 %v101
    %v183 = vunpack.c.l.b16 %v102
    %v184 = vunpack.c.l.b16 %v103
    %v185 = vunpack.c.l.b16 %v104
    %v186 = vunpack.c.l.b16 %v105
    %v187 = vunpack.c.l.b16 %v106
    %v188 = vunpack.c.l.b16 %v107
    %v189 = vunpack.c.l.b16 %v108
    %v190 = vunpack.c.l.b16 %v109
    %v191 = vunpack.c.l.b16 %v110
    %v192 = vunpack.c.l.b16 %v111
    %v193 = vunpack.c.l.b16 %v112
    %v194 = vunpack.c.l.b16 %v113
    %v195 = vpack.c.b16 %v164, %v163
    %v196 = vpack.c.b16 %v166, %v165
    %v197 = vpack.c.b16 %v168, %v167
    %v198 = vpack.c.b16 %v170, %v169
    %v199 = vpack.c.b16 %v172, %v171
    %v200 = vpack.c.b16 %v174, %v173
    %v201 = vpack.c.b16 %v176, %v175
    %v202 = vpack.c.b16 %v178, %v177
    %v203 = vpack.c.b16 %v180, %v179
    %v204 = vpack.c.b16 %v182, %v181
    %v205 = vpack.c.b16 %v184, %v183
    %v206 = vpack.c.b16 %v186, %v185
    %v207 = vpack.c.b16 %v188, %v187
    %v208 = vpack.c.b16 %v190, %v189
    %v209 = vpack.c.b16 %v192, %v191
    %v210 = vpack.c.b16 %v194, %v193
    %227 = vmatprep.subr.bf16.mxu0 0
    %228 = vmatpush1.bf16.msra.mxu0 %v202
    %229 = vmatprep.subr.bf16.mxu0 0
    %230 = vmatpush1.bf16.msra.mxu0 %v201
    %231 = vmatprep.subr.bf16.mxu0 0
    %232 = vmatpush1.bf16.msra.mxu0 %v200
    %233 = vmatprep.subr.bf16.mxu0 0
    %234 = vmatpush1.bf16.msra.mxu0 %v199
    %235 = vmatprep.subr.bf16.mxu0 0
    %236 = vmatpush1.bf16.msra.mxu0 %v198
    %237 = vmatprep.subr.bf16.mxu0 0
    %238 = vmatpush1.bf16.msra.mxu0 %v197
    %239 = vmatprep.subr.bf16.mxu0 0
    %240 = vmatpush1.bf16.msra.mxu0 %v196
    %241 = vmatprep.subr.bf16.mxu0 0
    %242 = vmatpush1.bf16.msra.mxu0 %v195
    %243 = vmatprep.subr.bf16.mxu0 0
    %244 = vmatpush2.bf16.msra.mxu0 %v210
    %245 = vmatprep.subr.bf16.mxu0 0
    %246 = vmatpush2.bf16.msra.mxu0 %v209
    %247 = vmatprep.subr.bf16.mxu0 0
    %248 = vmatpush2.bf16.msra.mxu0 %v208
    %249 = vmatprep.subr.bf16.mxu0 0
    %250 = vmatpush2.bf16.msra.mxu0 %v207
    %251 = vmatprep.subr.bf16.mxu0 0
    %252 = vmatpush2.bf16.msra.mxu0 %v206
    %253 = vmatprep.subr.bf16.mxu0 0
    %254 = vmatpush2.bf16.msra.mxu0 %v205
    %255 = vmatprep.subr.bf16.mxu0 0
    %256 = vmatpush2.bf16.msra.mxu0 %v204
    %257 = vmatprep.subr.bf16.mxu0 0
    %258 = vmatpush2.bf16.msra.mxu0 %v203
    %259 = vmatprep.mubr.bf16.mxu0 %v128
    %260 = vmatmul.mubr.bf16.gmra.mxu0 %v127
    %v261 = vpop.f32.mrf.mxu0
    %v262 = vadd.f32 %v119, %v261
    %v263 = vpop.f32.mrf.mxu0
    %v264 = vpop.f32.mrf.mxu0
    %v265 = vadd.f32 %v119, %v264
    %v266 = vpop.f32.mrf.mxu0
    %267 = vdwg.mxu0
    %v268 = vmul.f32 %v262, %v262
    %v269 = vmul.f32 %v265, %v265
    %v270 = vmul.f32 %v262, %v268
    %v271 = vmul.f32 %v265, %v269
    %v272 = vmul.f32 %v270, 0.044715
    %v273 = vmul.f32 %v271, 0.044715
    %v274 = vadd.f32 %v262, %v272
    %v275 = vadd.f32 %v265, %v273
    %v276 = vmul.f32 %v274, 0.7978846
    %v277 = vmul.f32 %v275, 0.7978846
    %v278 = vtanh.pop %v276
    %v279 = vtanh.pop %v277
    %v280 = vadd.f32 %v278, 1.0
    %v281 = vadd.f32 %v279, 1.0
    %v282 = vmul.f32 %v280, 0.5
    %v283 = vmul.f32 %v281, 0.5
    %v284 = vmul.f32 %v262, %v282
    %v285 = vmul.f32 %v265, %v283
    %v286 = vpack.c.bf16 %v285, %v284
    %v287 = vld [vmem:[#allocation8] sm:$0xf]
    %v288 = vld [vmem:[#allocation8 + $0x4] sm:$0xf]
    %v289 = vld [vmem:[#allocation8 + $0x8] sm:$0xf]
    %v290 = vld [vmem:[#allocation8 + $0xc] sm:$0xf]
    %v291 = vld [vmem:[#allocation8 + $0x10] sm:$0xf]
    %v292 = vld [vmem:[#allocation8 + $0x14] sm:$0xf]
    %v293 = vld [vmem:[#allocation8 + $0x18] sm:$0xf]
    %v294 = vld [vmem:[#allocation8 + $0x1c] sm:$0xf]
    %v295 = vld [vmem:[#allocation8 + $0x20] sm:$0xf]
    %v296 = vld [vmem:[#allocation8 + $0x24] sm:$0xf]
    %v297 = vld [vmem:[#allocation8 + $0x28] sm:$0xf]
    %v298 = vld [vmem:[#allocation8 + $0x2c] sm:$0xf]
    %v299 = vld [vmem:[#allocation8 + $0x30] sm:$0xf]
    %v300 = vld [vmem:[#allocation8 + $0x34] sm:$0xf]
    %v301 = vld [vmem:[#allocation8 + $0x38] sm:$0xf]
    %v302 = vld [vmem:[#allocation8 + $0x3c] sm:$0xf]
    %v303 = vld [vmem:[%s5] sm:$0x1]
    %v305 = vlaneseq
    %v306 = vshrl.u32 %v305, 7
    %v307 = vsub.s32 0, %v306
    %v308 = vrot.slane %v303, %v307
    %v326 = vunpack.c.l.b16 %v287
    %v327 = vunpack.c.l.b16 %v288
    %v328 = vunpack.c.l.b16 %v289
    %v329 = vunpack.c.l.b16 %v290
    %v330 = vunpack.c.l.b16 %v291
    %v331 = vunpack.c.l.b16 %v292
    %v332 = vunpack.c.l.b16 %v293
    %v333 = vunpack.c.l.b16 %v294
    %v334 = vunpack.c.l.b16 %v295
    %v335 = vunpack.c.l.b16 %v296
    %v336 = vunpack.c.l.b16 %v297
    %v337 = vunpack.c.l.b16 %v298
    %v338 = vunpack.c.l.b16 %v299
    %v339 = vunpack.c.l.b16 %v300
    %v340 = vunpack.c.l.b16 %v301
    %v341 = vunpack.c.l.b16 %v302
    %v342 = vpack.c.b16 %v327, %v326
    %v343 = vpack.c.b16 %v329, %v328
    %v344 = vpack.c.b16 %v331, %v330
    %v345 = vpack.c.b16 %v333, %v332
    %v346 = vpack.c.b16 %v335, %v334
    %v347 = vpack.c.b16 %v337, %v336
    %v348 = vpack.c.b16 %v339, %v338
    %v349 = vpack.c.b16 %v341, %v340
    %358 = vmatprep.subr.bf16.mxu0 0
    %359 = vmatpush1.bf16.msra.mxu0 %v349
    %360 = vmatprep.subr.bf16.mxu0 0
    %361 = vmatpush1.bf16.msra.mxu0 %v348
    %362 = vmatprep.subr.bf16.mxu0 0
    %363 = vmatpush1.bf16.msra.mxu0 %v347
    %364 = vmatprep.subr.bf16.mxu0 0
    %365 = vmatpush1.bf16.msra.mxu0 %v346
    %366 = vmatprep.subr.bf16.mxu0 0
    %367 = vmatpush1.bf16.msra.mxu0 %v345
    %368 = vmatprep.subr.bf16.mxu0 0
    %369 = vmatpush1.bf16.msra.mxu0 %v344
    %370 = vmatprep.subr.bf16.mxu0 0
    %371 = vmatpush1.bf16.msra.mxu0 %v343
    %372 = vmatprep.subr.bf16.mxu0 0
    %373 = vmatpush1.bf16.msra.mxu0 %v342
    %374 = vmatprep.subr.bf16.mxu0 0
    %375 = vmatpush2.bf16.msra.mxu0 0
    %376 = vmatprep.subr.bf16.mxu0 0
    %377 = vmatpush2.bf16.msra.mxu0 0
    %378 = vmatprep.subr.bf16.mxu0 0
    %379 = vmatpush2.bf16.msra.mxu0 0
    %380 = vmatprep.subr.bf16.mxu0 0
    %381 = vmatpush2.bf16.msra.mxu0 0
    %382 = vmatprep.subr.bf16.mxu0 0
    %383 = vmatpush2.bf16.msra.mxu0 0
    %384 = vmatprep.subr.bf16.mxu0 0
    %385 = vmatpush2.bf16.msra.mxu0 0
    %386 = vmatprep.subr.bf16.mxu0 0
    %387 = vmatpush2.bf16.msra.mxu0 0
    %388 = vmatprep.subr.bf16.mxu0 0
    %389 = vmatpush2.bf16.msra.mxu0 0
    %390 = vmatprep.mubr.bf16.mxu0 0
    %391 = vmatmul.mubr.bf16.gmra.mxu0 %v286
    %v392 = vpop.f32.mrf.mxu0
    %v393 = vadd.f32 %v308, %v392
    %v394 = vpop.f32.mrf.mxu0
    %v395 = vpop.f32.mrf.mxu0
    %v396 = vadd.f32 %v308, %v395
    %v397 = vpop.f32.mrf.mxu0
    %398 = vdwg.mxu0
    %v399 = vld [vmem:[#allocation2] sm:$0xff]
    %v400 = vld [vmem:[#allocation2 + $0x8] sm:$0xff]
    %v401 = vadd.f32 %v393, %v399
    %v402 = vadd.f32 %v396, %v400
    %403 = vst [vmem:[#allocation10] sm:$0xff] %v401
    %404 = vst [vmem:[#allocation10 + $0x8] sm:$0xff] %v402
    // Predicated region
    $region42: #{tpu_custom_call.1} parent=1 // pred_check
      _
    $region43: #{tpu_custom_call.1} parent=1 // pred_check_branch
      %406 = sbr.rel (0) target = $region45
    $region44: #{tpu_custom_call.1} parent=1 // pred_region
      %s408 = ssub.s32 256, 256
      %409 = vsyncadd [#allocation4], %s408
      %s410 = sshll.u32 [#allocation10], 4
      %s411 = int_to_ptr.vmem [resolvable:$true] %s410
      %416 = dma.vmem_to_hbm [thread:$0]  %s411, 256, %s6, [#allocation4], 128, 128, 8
    $region45: #{tpu_custom_call.1} parent=1 // pred_fallthru
      _
    // Predicated region
    $region46: #{tpu_custom_call.1} parent=1 // pred_check
      _
    $region47: #{tpu_custom_call.1} parent=1 // pred_check_branch
      %418 = sbr.rel (0) target = $region49
    $region48: #{tpu_custom_call.1} parent=1 // pred_region
      %419 = dma.done [#allocation4], 256
    $region49: #{tpu_custom_call.1} parent=1 // pred_fallthru
      _
    %420 = vsyncpa [#allocation3], 1
    %421 = vsyncpa [#allocation6], 1
    %422 = vsyncpa [#allocation9], 1
    %423 = vsyncpa [#allocation4], 1

</llo_original>
